<compile_context>
chip_gen: v6e
topology: v6e:2x2x1
jax: 0.10.0
libtpu: 0.0.40
codegen_flags: <defaults>
</compile_context>

<pallas_src>
import jax
import jax.numpy as jnp
from jax.experimental import pallas as pl
from jax.experimental.pallas import tpu as pltpu

EPS = 1e-6


def _round_up(n, m):
    return -(-n // m) * m


def _looc_kernel(x_ref, w_ref, aa_ref, ww_ref, o_ref):
    # x_ref: (tb, D), w_ref: (D, tc), aa_ref: (tb, 1), ww_ref: (1, tc)
    xw = jnp.dot(x_ref[...], w_ref[...],
                 preferred_element_type=jnp.float32)          # MXU, (tb, tc)
    sq = jnp.maximum(aa_ref[...] + ww_ref[...] - 2.0 * xw, 0.0)
    o_ref[...] = jnp.sqrt(sq)


def looc_forward(x, weight, *, tb=256, tc=512):
    """x: (B, D); weight: (1, D, C) -> (B, C) float32 per-class distances."""
    B, D = x.shape
    w = weight.reshape(weight.shape[-2], weight.shape[-1]).astype(jnp.float32)
    C = w.shape[1]
    x = x.astype(jnp.float32)

    # --- tile selection -----------------------------------------------------
    # Classes on the lane axis: keep the whole (128-padded) weight resident
    # when C is small, otherwise tile at a multiple of 128.
    tc = max(128, min((tc // 128) * 128, _round_up(C, 128)))
    # Batch on the sublane axis: MXU-filling tiles; no padding if B fits one.
    if B <= tb:
        tb = B
    else:
        tb = max(8, (tb // 8) * 8)

    # Keep the double-buffered working set under the 32 MiB scoped-VMEM
    # default (safe on v5e/v6e and within v7x's 64 MiB VMEM with no flags).
    def vmem_bytes(tb_, tc_):
        return 2 * 4 * (tb_ * D + D * tc_ + tb_ * tc_ + tb_ + tc_)

    budget = 24 << 20
    while tc > 128 and vmem_bytes(tb, tc) > budget:
        tc -= 128
    while B > tb >= 16 and vmem_bytes(tb, tc) > budget:
        tb //= 2
    # NOTE: for extremely large D the full-D operand tiles could still exceed
    # the budget; that regime would need a K-tiled grid ("arbitrary" axis +
    # f32 accumulator).  Typical GenODIN feature dims never hit it.

    Bp = _round_up(B, tb)
    Cp = _round_up(C, tc)

    # --- operand padding, only when shapes actually need it -----------------
    # Padded weight columns are zeros -> their fake distances are sliced off;
    # the D (reduction) axis is never padded, so valid entries are exact.
    # (The weight pad could be hoisted to parameter-setup time since it is
    #  static per model.)
    if Bp != B:
        x = jnp.zeros((Bp, D), jnp.float32).at[:B, :].set(x)
    if Cp != C:
        w = jnp.zeros((D, Cp), jnp.float32).at[:, :C].set(w)

    # --- hoisted norm terms (computed once, never per grid step) ------------
    aa = (jnp.sum(x * x, axis=1, keepdims=True)
          + (2.0 * EPS) * jnp.sum(x, axis=1, keepdims=True)
          + jnp.float32(D * EPS * EPS))                       # (Bp, 1)
    ww = (jnp.sum(w * w, axis=0, keepdims=True)
          - (2.0 * EPS) * jnp.sum(w, axis=0, keepdims=True))  # (1, Cp)

    grid = (Bp // tb, Cp // tc)
    out = pl.pallas_call(
        _looc_kernel,
        out_shape=jax.ShapeDtypeStruct((Bp, Cp), jnp.float32),
        grid_spec=pltpu.PrefetchScalarGridSpec(
            num_scalar_prefetch=0,
            grid=grid,
            in_specs=[
                pl.BlockSpec((tb, D), lambda i, j: (i, 0)),   # x tile (full D)
                pl.BlockSpec((D, tc), lambda i, j: (0, j)),   # w tile (full D)
                pl.BlockSpec((tb, 1), lambda i, j: (i, 0)),   # row norms
                pl.BlockSpec((1, tc), lambda i, j: (0, j)),   # class norms
            ],
            out_specs=pl.BlockSpec((tb, tc), lambda i, j: (i, j)),
        ),
        compiler_params=pltpu.CompilerParams(
            dimension_semantics=("parallel", "parallel")),
        cost_estimate=pl.CostEstimate(
            flops=2 * Bp * D * Cp,
            transcendentals=Bp * Cp,
            bytes_accessed=4 * (Bp * D + D * Cp + Bp * Cp + Bp + Cp)),
    )(x, w, aa, ww)

    if (Bp, Cp) != (B, C):
        out = out[:B, :C]
    return out


def looc_reference(x, weight):
    w = weight.reshape(weight.shape[-2], weight.shape[-1])        # (D, C)
    diff = x[:, :, None] - w[None, :, :] + EPS                    # (B, D, C)
    return jnp.sqrt(jnp.sum(diff * diff, axis=1))                 # (B, C)


if __name__ == "__main__":
    # Module config: looc_layer(out_classes=10, dimensions=32), batch=4.
    out_classes = 10
    dimensions = 32
    batch = 4

    key = jax.random.PRNGKey(0)
    kx, kw = jax.random.split(key)
    # torch.rand -> uniform [0, 1) init for the weight; deterministic here.
    weight = jax.random.uniform(kw, (1, dimensions, out_classes), jnp.float32)
    x = jax.random.normal(kx, (batch, dimensions), jnp.float32)

    out = jax.block_until_ready(looc_forward(x, weight))
    ref = looc_reference(x, weight)
    assert out.shape == (batch, out_classes), out.shape
    assert jnp.allclose(out, ref, rtol=2e-3, atol=2e-3), (
        "max abs err %g" % float(jnp.max(jnp.abs(out - ref))))

    # Exercise the tiled/padded paths too: B > tb (padded batch grid) and
    # C > 512 (multiple class tiles).
    k2x, k2w = jax.random.split(jax.random.PRNGKey(1))
    w2 = jax.random.uniform(k2w, (1, 64, 700), jnp.float32)
    x2 = jax.random.normal(k2x, (300, 64), jnp.float32)
    out2 = jax.block_until_ready(looc_forward(x2, w2))
    ref2 = looc_reference(x2, w2)
    assert out2.shape == (300, 700), out2.shape
    assert jnp.allclose(out2, ref2, rtol=2e-3, atol=2e-3), (
        "max abs err %g" % float(jnp.max(jnp.abs(out2 - ref2))))

    print("KERNEL_OK")
</pallas_src>

<mosaic_0001>
module attributes {stable_mosaic.version = 11 : i64} {
  func.func @_looc_kernel(%arg0: i32, %arg1: i32, %arg2: memref<4x32xf32, #tpu.memory_space<vmem>>, %arg3: memref<32x128xf32, #tpu.memory_space<vmem>>, %arg4: memref<4x1xf32, #tpu.memory_space<vmem>>, %arg5: memref<1x128xf32, #tpu.memory_space<vmem>>, %arg6: memref<4x128xf32, #tpu.memory_space<vmem>>) attributes {dimension_semantics = [#tpu.dimension_semantics<parallel>, #tpu.dimension_semantics<parallel>], iteration_bounds = array<i64: 1, 1>, scalar_prefetch = 0 : i64, scratch_operands = 0 : i64, tpu.core_type = #tpu.core_type<tc>, window_params = [{transform_indices = @transform_0, window_bounds = array<i64: 4, 32>}, {transform_indices = @transform_1, window_bounds = array<i64: 32, 128>}, {transform_indices = @transform_2, window_bounds = array<i64: 4, 1>}, {transform_indices = @transform_3, window_bounds = array<i64: 1, 128>}, {transform_indices = @transform_4, window_bounds = array<i64: 4, 128>}]} {
    %c0 = arith.constant 0 : index
    %c0_0 = arith.constant 0 : index
    %0 = vector.load %arg2[%c0, %c0_0] : memref<4x32xf32, #tpu.memory_space<vmem>>, vector<4x32xf32>
    %c0_1 = arith.constant 0 : index
    %c0_2 = arith.constant 0 : index
    %1 = vector.load %arg3[%c0_1, %c0_2] : memref<32x128xf32, #tpu.memory_space<vmem>>, vector<32x128xf32>
    %cst = arith.constant dense<0.000000e+00> : vector<4x128xf32>
    %2 = tpu.matmul %0, %1, %cst {dimension_numbers = #tpu.dot_dimension_numbers<[1], [0], [0], [1], [0, 0, 1, 1], [], []>} : vector<4x32xf32>, vector<32x128xf32>, vector<4x128xf32> -> vector<4x128xf32>
    %c0_3 = arith.constant 0 : index
    %c0_4 = arith.constant 0 : index
    %3 = vector.load %arg4[%c0_3, %c0_4] : memref<4x1xf32, #tpu.memory_space<vmem>>, vector<4x1xf32>
    %c0_5 = arith.constant 0 : index
    %c0_6 = arith.constant 0 : index
    %4 = vector.load %arg5[%c0_5, %c0_6] : memref<1x128xf32, #tpu.memory_space<vmem>>, vector<1x128xf32>
    %5 = vector.broadcast %3 : vector<4x1xf32> to vector<4x128xf32>
    %6 = vector.broadcast %4 : vector<1x128xf32> to vector<4x128xf32>
    %7 = arith.addf %5, %6 : vector<4x128xf32>
    %cst_7 = arith.constant 2.000000e+00 : f32
    %8 = vector.broadcast %cst_7 : f32 to vector<4x128xf32>
    %9 = arith.mulf %8, %2 : vector<4x128xf32>
    %10 = arith.subf %7, %9 : vector<4x128xf32>
    %cst_8 = arith.constant 0.000000e+00 : f32
    %11 = vector.broadcast %cst_8 : f32 to vector<4x128xf32>
    %12 = arith.maximumf %10, %11 : vector<4x128xf32>
    %13 = math.sqrt %12 : vector<4x128xf32>
    %c0_9 = arith.constant 0 : index
    %c0_10 = arith.constant 0 : index
    %14 = vector.load %arg6[%c0_9, %c0_10] : memref<4x128xf32, #tpu.memory_space<vmem>>, vector<4x128xf32>
    tpu.vector_store %arg6[%c0_9, %c0_10], %13 {strides = array<i32>} : memref<4x128xf32, #tpu.memory_space<vmem>>, vector<4x128xf32>,
    return
  }
  func.func @transform_0(%arg0: i32, %arg1: i32) -> (i32, i32) {
    %c0_i32 = arith.constant 0 : i32
    %c0_i32_0 = arith.constant 0 : i32
    return %arg0, %c0_i32 : i32, i32
  }
  func.func @transform_1(%arg0: i32, %arg1: i32) -> (i32, i32) {
    %c0_i32 = arith.constant 0 : i32
    %c0_i32_0 = arith.constant 0 : i32
    return %c0_i32, %arg1 : i32, i32
  }
  func.func @transform_2(%arg0: i32, %arg1: i32) -> (i32, i32) {
    %c0_i32 = arith.constant 0 : i32
    %c0_i32_0 = arith.constant 0 : i32
    return %arg0, %c0_i32 : i32, i32
  }
  func.func @transform_3(%arg0: i32, %arg1: i32) -> (i32, i32) {
    %c0_i32 = arith.constant 0 : i32
    %c0_i32_0 = arith.constant 0 : i32
    return %c0_i32, %arg1 : i32, i32
  }
  func.func @transform_4(%arg0: i32, %arg1: i32) -> (i32, i32) {
    %c0_i32 = arith.constant 0 : i32
    return %arg0, %arg1 : i32, i32
  }
}

</mosaic_0001>

<llo_original>
// kernel: tpu_custom_call.1
$region0: #{tpu_custom_call.1}
  #allocation0 [shape = 'u32[]', space=smem, size = 0x4, offset = 0x4, fixed_abs, tag = 'smem constant byte address 0x4 - core index']
  #allocation1 [shape = 'u32[144,128]{1,0:T(1,128)}', space=vmem, size = 0x12000, scoped, tag = 'internal scratch']
  %s0 = inlined_call_operand.vmem [shape: f32[4,32], index: 0, kind: input, shape index: {}]
  %s1 = inlined_call_operand.hbm [shape: f32[32,128], index: 1, kind: input, shape index: {}]
  %s2 = inlined_call_operand.vmem [shape: f32[4,1], index: 2, kind: input, shape index: {}]
  %s3 = inlined_call_operand.vmem [shape: f32[1,128], index: 3, kind: input, shape index: {}]
  %s4 = inlined_call_operand.hbm [shape: f32[4,128], index: 4, kind: output, shape index: {}]
  %s5 = sld [smem:[#allocation0]]
  $region30: #{tpu_custom_call.1} parent=0
    _
  %s7 = ssub.s32 1, %s5
  %s8 = scalar_select 0, %s7, %s5
  $region1: #{tpu_custom_call.1} parent=0
    #allocation2 [shape = 'u8[16384]{0}', space=vmem, size = 0x4000, scoped, tag = 'input window, operand 1, single buffered']
    #allocation3 [shape = 's32[1]{0}', space=sflag, size = 0x4, scoped, tag = 'scoped memory for tpu_custom_call.1']
    #allocation4 [shape = 's32[1]{0}', space=sflag, size = 0x4, scoped, tag = 'scoped memory for tpu_custom_call.1']
    #allocation5 [shape = 'u8[2048]{0}', space=vmem, size = 0x800, scoped, tag = 'output window, operand 0, single buffered']
    %9 = vsyncpa [#allocation3], 0
    %10 = vsyncpa [#allocation4], 0
    // Predicated region
    $region2: #{tpu_custom_call.1} parent=1 // pred_check
      _
    $region3: #{tpu_custom_call.1} parent=1 // pred_check_branch
      %12 = sbr.rel (0) target = $region5
    $region4: #{tpu_custom_call.1} parent=1 // pred_region
      _
    $region5: #{tpu_custom_call.1} parent=1 // pred_fallthru
      _
    // Predicated region
    $region6: #{tpu_custom_call.1} parent=1 // pred_check
      _
    $region7: #{tpu_custom_call.1} parent=1 // pred_check_branch
      %14 = sbr.rel (0) target = $region9
    $region8: #{tpu_custom_call.1} parent=1 // pred_region
      %s16 = ssub.s32 512, 512
      %17 = vsyncadd [#allocation3], %s16
      %s18 = sshll.u32 [#allocation2], 4
      %s19 = int_to_ptr.vmem [resolvable:$true] %s18
      %24 = dma.hbm_to_vmem [thread:$0]  %s1, 512, %s19, [#allocation3], 128, 128, 8
    $region9: #{tpu_custom_call.1} parent=1 // pred_fallthru
      _
    // Predicated region
    $region10: #{tpu_custom_call.1} parent=1 // pred_check
      _
    $region11: #{tpu_custom_call.1} parent=1 // pred_check_branch
      %26 = sbr.rel (0) target = $region13
    $region12: #{tpu_custom_call.1} parent=1 // pred_region
      _
    $region13: #{tpu_custom_call.1} parent=1 // pred_fallthru
      _
    // Predicated region
    $region14: #{tpu_custom_call.1} parent=1 // pred_check
      _
    $region15: #{tpu_custom_call.1} parent=1 // pred_check_branch
      %28 = sbr.rel (0) target = $region17
    $region16: #{tpu_custom_call.1} parent=1 // pred_region
      _
    $region17: #{tpu_custom_call.1} parent=1 // pred_fallthru
      _
    // Predicated region
    $region18: #{tpu_custom_call.1} parent=1 // pred_check
      _
    $region19: #{tpu_custom_call.1} parent=1 // pred_check_branch
      %30 = sbr.rel (0) target = $region21
    $region20: #{tpu_custom_call.1} parent=1 // pred_region
      %31 = dma.done [#allocation3], 512
    $region21: #{tpu_custom_call.1} parent=1 // pred_fallthru
      _
    %v32 = vld [vmem:[%s0] sm:$0xf]
    %v33 = vld [vmem:[#allocation2] sm:$0xff]
    %v34 = vld [vmem:[#allocation2 + $0x8] sm:$0xff]
    %v35 = vld [vmem:[#allocation2 + $0x10] sm:$0xff]
    %v36 = vld [vmem:[#allocation2 + $0x18] sm:$0xff]
    %vm37 = vcmask 261120
    %v39 = vsel %vm37, %v32, 0
    %41 = vmatprep.subr.mxu0 0.0
    %42 = vmatpush1.msra.mxu0 0.0
    %43 = vmatprep.subr.mxu0 0.0
    %44 = vmatpush1.msra.mxu0 0.0
    %45 = vmatprep.subr.mxu0 0.0
    %46 = vmatpush1.msra.mxu0 0.0
    %47 = vmatprep.subr.mxu0 0.0
    %48 = vmatpush1.msra.mxu0 0.0
    %49 = vmatprep.subr.mxu0 0.0
    %50 = vmatpush1.msra.mxu0 0.0
    %51 = vmatprep.subr.mxu0 0.0
    %52 = vmatpush1.msra.mxu0 0.0
    %53 = vmatprep.subr.mxu0 0.0
    %54 = vmatpush1.msra.mxu0 0.0
    %55 = vmatprep.subr.mxu0 0.0
    %56 = vmatpush1.msra.mxu0 0.0
    %57 = vmatprep.subr.mxu0 0.0
    %58 = vmatpush1.msra.mxu0 0.0
    %59 = vmatprep.subr.mxu0 0.0
    %60 = vmatpush1.msra.mxu0 0.0
    %61 = vmatprep.subr.mxu0 0.0
    %62 = vmatpush1.msra.mxu0 0.0
    %63 = vmatprep.subr.mxu0 0.0
    %64 = vmatpush1.msra.mxu0 0.0
    %65 = vmatprep.subr.mxu0 0.0
    %66 = vmatpush1.msra.mxu0 %v36
    %67 = vmatprep.subr.mxu0 0.0
    %68 = vmatpush1.msra.mxu0 %v35
    %69 = vmatprep.subr.mxu0 0.0
    %70 = vmatpush1.msra.mxu0 %v34
    %71 = vmatprep.subr.mxu0 0.0
    %72 = vmatpush1.msra.mxu0 %v33
    %73 = vmatprep.subr.mxu0 0.0
    %74 = vmatpush2.msra.mxu0 0.0
    %75 = vmatprep.subr.mxu0 0.0
    %76 = vmatpush2.msra.mxu0 0.0
    %77 = vmatprep.subr.mxu0 0.0
    %78 = vmatpush2.msra.mxu0 0.0
    %79 = vmatprep.subr.mxu0 0.0
    %80 = vmatpush2.msra.mxu0 0.0
    %81 = vmatprep.subr.mxu0 0.0
    %82 = vmatpush2.msra.mxu0 0.0
    %83 = vmatprep.subr.mxu0 0.0
    %84 = vmatpush2.msra.mxu0 0.0
    %85 = vmatprep.subr.mxu0 0.0
    %86 = vmatpush2.msra.mxu0 0.0
    %87 = vmatprep.subr.mxu0 0.0
    %88 = vmatpush2.msra.mxu0 0.0
    %89 = vmatprep.subr.mxu0 0.0
    %90 = vmatpush2.msra.mxu0 0.0
    %91 = vmatprep.subr.mxu0 0.0
    %92 = vmatpush2.msra.mxu0 0.0
    %93 = vmatprep.subr.mxu0 0.0
    %94 = vmatpush2.msra.mxu0 0.0
    %95 = vmatprep.subr.mxu0 0.0
    %96 = vmatpush2.msra.mxu0 0.0
    %97 = vmatprep.subr.mxu0 0.0
    %98 = vmatpush2.msra.mxu0 0.0
    %99 = vmatprep.subr.mxu0 0.0
    %100 = vmatpush2.msra.mxu0 0.0
    %101 = vmatprep.subr.mxu0 0.0
    %102 = vmatpush2.msra.mxu0 0.0
    %103 = vmatprep.subr.mxu0 0.0
    %104 = vmatpush2.msra.mxu0 0.0
    %105 = vmatprep.mubr.f32.mxu0 0.0
    %106 = vmatmul.mubr.f32.gmra.mxu0 %v39
    %v107 = vpop.f32.mrf.mxu0
    %v108 = vadd.f32 0.0, %v107
    %v109 = vpop.f32.mrf.mxu0
    %110 = vdwg.mxu0
    %v111 = vld [vmem:[%s2] sm:$0xf]
    %v112 = vld [vmem:[%s3] sm:$0x1]
    %114 = vset.pattern.permute.xlu0 0
    %115 = vperm.xlu0 %114, %v111
    %v116 = vpop.permute.xlu0 %115
    %v119 = vlaneseq
    %v120 = vshrl.u32 %v119, 7
    %v121 = vsub.s32 0, %v120
    %v122 = vrot.slane %v112, %v121
    %v124 = vadd.f32 %v116, %v122
    %v125 = vmul.f32 %v108, 2.0
    %v126 = vsub.f32 %v124, %v125
    %v127 = vmax.f32 %v126, 0.0
    %v128 = vrsqrt.pop %v127
    %v129 = vmul.f32 %v127, %v128
    %vm130 = vcmp.eq.f32.partialorder %v127, inf
    %v131 = vsel %vm130, %v127, %v129
    %vm132 = vcmp.eq.f32.partialorder %v127, 0.0
    %v133 = vand.u32 %v127, 2147483648
    %v134 = vsel %vm132, %v133, %v131
    %135 = vst [vmem:[#allocation5] sm:$0xf] %v134
    // Predicated region
    $region22: #{tpu_custom_call.1} parent=1 // pred_check
      _
    $region23: #{tpu_custom_call.1} parent=1 // pred_check_branch
      %137 = sbr.rel (0) target = $region25
    $region24: #{tpu_custom_call.1} parent=1 // pred_region
      %s139 = ssub.s32 64, 64
      %140 = vsyncadd [#allocation4], %s139
      %s142 = sshll.u32 [#allocation5], 4
      %s143 = int_to_ptr.vmem [resolvable:$true] %s142
      %145 = dma.vmem_to_hbm [thread:$0]  %s143, 64, %s4, [#allocation4]
    $region25: #{tpu_custom_call.1} parent=1 // pred_fallthru
      _
    // Predicated region
    $region26: #{tpu_custom_call.1} parent=1 // pred_check
      _
    $region27: #{tpu_custom_call.1} parent=1 // pred_check_branch
      %147 = sbr.rel (0) target = $region29
    $region28: #{tpu_custom_call.1} parent=1 // pred_region
      %148 = dma.done [#allocation4], 64
    $region29: #{tpu_custom_call.1} parent=1 // pred_fallthru
      _
    %149 = vsyncpa [#allocation3], 1
    %150 = vsyncpa [#allocation4], 1

</llo_original>
